<compile_context>
chip_gen: v7x
topology: tpu7x:2x2x1
jax: 0.10.0
libtpu: 0.0.40
codegen_flags: <defaults>
</compile_context>

<pallas_src>
import functools

import jax
import jax.numpy as jnp
from jax.experimental import pallas as pl
from jax.experimental.pallas import tpu as pltpu


def _make_mlp_kernel(use_bf16: bool):
    def mlp_kernel(x_ref, w1t_ref, b1_ref, w2t_ref, b2_ref, o_ref):
        x = x_ref[...]
        w1t = w1t_ref[...]
        w2t = w2t_ref[...]
        if use_bf16:
            # Feed the MXU bf16 operands (v6e/v7x fast path); keep f32 accum.
            x = x.astype(jnp.bfloat16)
            w1t = w1t.astype(jnp.bfloat16)
            w2t = w2t.astype(jnp.bfloat16)

        # First linear (MXU) + f32 bias + ReLU (VPU, f32 on all chips).
        h = jnp.dot(x, w1t, preferred_element_type=jnp.float32)
        h = jnp.maximum(h + b1_ref[...], 0.0)

        if use_bf16:
            h = h.astype(jnp.bfloat16)

        # Second linear (MXU) + f32 bias.
        y = jnp.dot(h, w2t, preferred_element_type=jnp.float32)
        o_ref[...] = (y + b2_ref[...]).astype(o_ref.dtype)

    return mlp_kernel


def prepare_params(w1, b1, w2, b2):
    """One-time conversion of PyTorch-layout params to kernel layout.

    w1: (hidden0, input_n)  -> w1t: (input_n, hidden0)
    w2: (output_n, hidden1) -> w2t: (hidden1, output_n)
    biases become 2-D rows for in-kernel broadcast.
    Do this once and keep the results; the hot path then has no transposes.
    """
    return w1.T, b1.reshape(1, -1), w2.T, b2.reshape(1, -1)


@functools.partial(jax.jit, static_argnames=("block_m", "use_bf16"))
def mlp_forward(x, w1t, b1_2d, w2t, b2_2d, *, block_m=256, use_bf16=False):
    """x: (B, input_n); w1t: (input_n, hidden); w2t: (hidden, output_n).

    Computes relu(x @ w1t + b1) @ w2t + b2  ==  PyTorch Linear/ReLU/Linear.
    Batch is tiled with tile size TM; weights/biases use a constant block
    index so they are loaded to VMEM once and reused across batch tiles.
    """
    B, input_n = x.shape
    hidden = w1t.shape[1]
    output_n = w2t.shape[1]

    # Full-batch block for small B, otherwise 256-row tiles (multiple of 8
    # sublanes, keeps per-step overhead <~15% and pipelines the x stream).
    tm = B if B <= block_m else block_m
    grid = (pl.cdiv(B, tm),)

    return pl.pallas_call(
        _make_mlp_kernel(use_bf16),
        out_shape=jax.ShapeDtypeStruct((B, output_n), x.dtype),
        grid=grid,
        in_specs=[
            pl.BlockSpec((tm, input_n), lambda i: (i, 0)),       # x tile
            pl.BlockSpec((input_n, hidden), lambda i: (0, 0)),   # W1^T (resident)
            pl.BlockSpec((1, hidden), lambda i: (0, 0)),         # b1   (resident)
            pl.BlockSpec((hidden, output_n), lambda i: (0, 0)),  # W2^T (resident)
            pl.BlockSpec((1, output_n), lambda i: (0, 0)),       # b2   (resident)
        ],
        out_specs=pl.BlockSpec((tm, output_n), lambda i: (i, 0)),
        compiler_params=pltpu.CompilerParams(
            # Batch tiles are independent -> parallel (2 TCs on v7x).
            dimension_semantics=("parallel",)),
    )(x, w1t, b1_2d, w2t, b2_2d)


if __name__ == "__main__":
    # Module hyperparameters (layer_list[0] must equal layer_list[1] for the
    # PyTorch forward to be shape-consistent).
    input_n = 16
    output_n = 8
    layer_list = [32, 32]
    batch = 8

    key = jax.random.PRNGKey(0)
    k_x, k_w1, k_b1, k_w2, k_b2 = jax.random.split(key, 5)

    # Deterministic parameter init (uniform, PyTorch-Linear-like bounds).
    bound1 = 1.0 / (input_n ** 0.5)
    bound2 = 1.0 / (layer_list[1] ** 0.5)
    w1 = jax.random.uniform(k_w1, (layer_list[0], input_n), jnp.float32,
                            -bound1, bound1)
    b1 = jax.random.uniform(k_b1, (layer_list[0],), jnp.float32,
                            -bound1, bound1)
    w2 = jax.random.uniform(k_w2, (output_n, layer_list[1]), jnp.float32,
                            -bound2, bound2)
    b2 = jax.random.uniform(k_b2, (output_n,), jnp.float32,
                            -bound2, bound2)

    x = jax.random.normal(k_x, (batch, input_n), jnp.float32)

    # One-time layout conversion (kept persistent; not on the hot path).
    w1t, b1_2d, w2t, b2_2d = prepare_params(w1, b1, w2, b2)
    w1t, b1_2d, w2t, b2_2d = jax.block_until_ready((w1t, b1_2d, w2t, b2_2d))

    # Reference in plain JAX (same math as the PyTorch forward).
    ref = jnp.maximum(x @ w1.T + b1, 0.0) @ w2.T + b2

    # f32 path: strict parity with the reference.
    out = jax.block_until_ready(mlp_forward(x, w1t, b1_2d, w2t, b2_2d))
    assert out.shape == (batch, output_n)
    assert jnp.allclose(out, ref, atol=1e-5, rtol=1e-5)

    # bf16 MXU path (v6e/v7x fast path): looser tolerance, f32 accumulate.
    out_bf16 = jax.block_until_ready(
        mlp_forward(x, w1t, b1_2d, w2t, b2_2d, use_bf16=True))
    assert jnp.allclose(out_bf16, ref, atol=3e-2, rtol=3e-2)

    print("KERNEL_OK")
</pallas_src>

<mosaic_0001>
module attributes {stable_mosaic.version = 11 : i64} {
  func.func @mlp_kernel(%arg0: i32, %arg1: memref<8x16xf32, #tpu.memory_space<vmem>>, %arg2: memref<16x32xf32, #tpu.memory_space<vmem>>, %arg3: memref<1x32xf32, #tpu.memory_space<vmem>>, %arg4: memref<32x8xf32, #tpu.memory_space<vmem>>, %arg5: memref<1x8xf32, #tpu.memory_space<vmem>>, %arg6: memref<8x8xf32, #tpu.memory_space<vmem>>) attributes {dimension_semantics = [#tpu.dimension_semantics<parallel>], iteration_bounds = array<i64: 1>, scalar_prefetch = 0 : i64, scratch_operands = 0 : i64, tpu.core_type = #tpu.core_type<tc>, window_params = [{transform_indices = @transform_0, window_bounds = array<i64: 8, 16>}, {pipeline_mode = #tpu.pipeline_mode<synchronous>, transform_indices = @transform_1, window_bounds = array<i64: 16, 32>}, {pipeline_mode = #tpu.pipeline_mode<synchronous>, transform_indices = @transform_2, window_bounds = array<i64: 1, 32>}, {pipeline_mode = #tpu.pipeline_mode<synchronous>, transform_indices = @transform_3, window_bounds = array<i64: 32, 8>}, {pipeline_mode = #tpu.pipeline_mode<synchronous>, transform_indices = @transform_4, window_bounds = array<i64: 1, 8>}, {transform_indices = @transform_5, window_bounds = array<i64: 8, 8>}]} {
    %c0 = arith.constant 0 : index
    %c0_0 = arith.constant 0 : index
    %0 = vector.load %arg1[%c0, %c0_0] : memref<8x16xf32, #tpu.memory_space<vmem>>, vector<8x16xf32>
    %c0_1 = arith.constant 0 : index
    %c0_2 = arith.constant 0 : index
    %1 = vector.load %arg2[%c0_1, %c0_2] : memref<16x32xf32, #tpu.memory_space<vmem>>, vector<16x32xf32>
    %c0_3 = arith.constant 0 : index
    %c0_4 = arith.constant 0 : index
    %2 = vector.load %arg4[%c0_3, %c0_4] : memref<32x8xf32, #tpu.memory_space<vmem>>, vector<32x8xf32>
    %cst = arith.constant dense<0.000000e+00> : vector<8x32xf32>
    %3 = tpu.matmul %0, %1, %cst {dimension_numbers = #tpu.dot_dimension_numbers<[1], [0], [0], [1], [0, 0, 1, 1], [], []>} : vector<8x16xf32>, vector<16x32xf32>, vector<8x32xf32> -> vector<8x32xf32>
    %c0_5 = arith.constant 0 : index
    %c0_6 = arith.constant 0 : index
    %4 = vector.load %arg3[%c0_5, %c0_6] : memref<1x32xf32, #tpu.memory_space<vmem>>, vector<1x32xf32>
    %5 = vector.broadcast %4 : vector<1x32xf32> to vector<8x32xf32>
    %6 = arith.addf %3, %5 : vector<8x32xf32>
    %cst_7 = arith.constant 0.000000e+00 : f32
    %7 = vector.broadcast %cst_7 : f32 to vector<8x32xf32>
    %8 = arith.maximumf %6, %7 : vector<8x32xf32>
    %cst_8 = arith.constant dense<0.000000e+00> : vector<8x8xf32>
    %9 = tpu.matmul %8, %2, %cst_8 {dimension_numbers = #tpu.dot_dimension_numbers<[1], [0], [0], [1], [0, 0, 1, 1], [], []>} : vector<8x32xf32>, vector<32x8xf32>, vector<8x8xf32> -> vector<8x8xf32>
    %c0_9 = arith.constant 0 : index
    %c0_10 = arith.constant 0 : index
    %10 = vector.load %arg5[%c0_9, %c0_10] : memref<1x8xf32, #tpu.memory_space<vmem>>, vector<1x8xf32>
    %11 = vector.broadcast %10 : vector<1x8xf32> to vector<8x8xf32>
    %12 = arith.addf %9, %11 : vector<8x8xf32>
    %c0_11 = arith.constant 0 : index
    %c0_12 = arith.constant 0 : index
    %13 = vector.load %arg6[%c0_11, %c0_12] : memref<8x8xf32, #tpu.memory_space<vmem>>, vector<8x8xf32>
    tpu.vector_store %arg6[%c0_11, %c0_12], %12 {strides = array<i32>} : memref<8x8xf32, #tpu.memory_space<vmem>>, vector<8x8xf32>,
    return
  }
  func.func @transform_0(%arg0: i32) -> (i32, i32) {
    %c0_i32 = arith.constant 0 : i32
    %c0_i32_0 = arith.constant 0 : i32
    return %arg0, %c0_i32 : i32, i32
  }
  func.func @transform_1(%arg0: i32) -> (i32, i32) {
    %c0_i32 = arith.constant 0 : i32
    %c0_i32_0 = arith.constant 0 : i32
    %c0_i32_1 = arith.constant 0 : i32
    return %c0_i32, %c0_i32_0 : i32, i32
  }
  func.func @transform_2(%arg0: i32) -> (i32, i32) {
    %c0_i32 = arith.constant 0 : i32
    %c0_i32_0 = arith.constant 0 : i32
    %c0_i32_1 = arith.constant 0 : i32
    return %c0_i32, %c0_i32_0 : i32, i32
  }
  func.func @transform_3(%arg0: i32) -> (i32, i32) {
    %c0_i32 = arith.constant 0 : i32
    %c0_i32_0 = arith.constant 0 : i32
    %c0_i32_1 = arith.constant 0 : i32
    return %c0_i32, %c0_i32_0 : i32, i32
  }
  func.func @transform_4(%arg0: i32) -> (i32, i32) {
    %c0_i32 = arith.constant 0 : i32
    %c0_i32_0 = arith.constant 0 : i32
    %c0_i32_1 = arith.constant 0 : i32
    return %c0_i32, %c0_i32_0 : i32, i32
  }
  func.func @transform_5(%arg0: i32) -> (i32, i32) {
    %c0_i32 = arith.constant 0 : i32
    %c0_i32_0 = arith.constant 0 : i32
    return %arg0, %c0_i32 : i32, i32
  }
}

</mosaic_0001>

<llo_original>
// kernel: mlp_forward.1
$region0: #{mlp_forward.1}
  #allocation0 [shape = 'u32[]', space=smem, size = 0x4, offset = 0x4, fixed_abs, tag = 'smem constant byte address 0x4 - core index']
  #allocation1 [shape = 'u32[144,128]{1,0:T(1,128)}', space=vmem, size = 0x12000, scoped, tag = 'internal scratch']
  %s0 = inlined_call_operand.vmem [shape: f32[8,16], index: 0, kind: input, shape index: {}]
  %s1 = inlined_call_operand.vmem [shape: f32[16,32], index: 1, kind: input, shape index: {}]
  %s2 = inlined_call_operand.vmem [shape: f32[1,32], index: 2, kind: input, shape index: {}]
  %s3 = inlined_call_operand.vmem [shape: f32[32,8], index: 3, kind: input, shape index: {}]
  %s4 = inlined_call_operand.vmem [shape: f32[1,8], index: 4, kind: input, shape index: {}]
  %s5 = inlined_call_operand.hbm [shape: f32[8,8], index: 5, kind: output, shape index: {}]
  %s6 = sld [smem:[#allocation0]]
  $region30: #{mlp_forward.1} parent=0
    _
  %s8 = ssub.s32 1, %s6
  %s9 = scalar_select 0, %s8, %s6
  $region1: #{mlp_forward.1} parent=0
    #allocation2 [shape = 'u8[4096]{0}', space=vmem, size = 0x1000, scoped, tag = 'output window, operand 0, single buffered']
    #allocation3 [shape = 's32[1]{0}', space=sflag, size = 0x4, scoped, tag = 'scoped memory for mlp_forward.1']
    %10 = vsyncpa [#allocation3], 0
    // Predicated region
    $region2: #{mlp_forward.1} parent=1 // pred_check
      _
    $region3: #{mlp_forward.1} parent=1 // pred_check_branch
      %12 = sbr.rel (0) target = $region5
    $region4: #{mlp_forward.1} parent=1 // pred_region
      _
    $region5: #{mlp_forward.1} parent=1 // pred_fallthru
      _
    // Predicated region
    $region6: #{mlp_forward.1} parent=1 // pred_check
      _
    $region7: #{mlp_forward.1} parent=1 // pred_check_branch
      %14 = sbr.rel (0) target = $region9
    $region8: #{mlp_forward.1} parent=1 // pred_region
      _
    $region9: #{mlp_forward.1} parent=1 // pred_fallthru
      _
    // Predicated region
    $region10: #{mlp_forward.1} parent=1 // pred_check
      _
    $region11: #{mlp_forward.1} parent=1 // pred_check_branch
      %16 = sbr.rel (0) target = $region13
    $region12: #{mlp_forward.1} parent=1 // pred_region
      _
    $region13: #{mlp_forward.1} parent=1 // pred_fallthru
      _
    // Predicated region
    $region14: #{mlp_forward.1} parent=1 // pred_check
      _
    $region15: #{mlp_forward.1} parent=1 // pred_check_branch
      %18 = sbr.rel (0) target = $region17
    $region16: #{mlp_forward.1} parent=1 // pred_region
      _
    $region17: #{mlp_forward.1} parent=1 // pred_fallthru
      _
    // Predicated region
    $region18: #{mlp_forward.1} parent=1 // pred_check
      _
    $region19: #{mlp_forward.1} parent=1 // pred_check_branch
      %20 = sbr.rel (0) target = $region21
    $region20: #{mlp_forward.1} parent=1 // pred_region
      _
    $region21: #{mlp_forward.1} parent=1 // pred_fallthru
      _
    %v21 = vld [vmem:[%s0] sm:$0xff]
    %v22 = vld [vmem:[%s1] sm:$0xff]
    %v23 = vld [vmem:[%s1 + $0x8] sm:$0xff]
    %v24 = vld [vmem:[%s3] sm:$0xff]
    %v25 = vld [vmem:[%s3 + $0x8] sm:$0xff]
    %v26 = vld [vmem:[%s3 + $0x10] sm:$0xff]
    %v27 = vld [vmem:[%s3 + $0x18] sm:$0xff]
    %v28 = vld [vmem:[%s2] sm:$0x1]
    %v30 = vlaneseq
    %v31 = vshrl.u32 %v30, 7
    %v32 = vsub.s32 0, %v31
    %v33 = vrot.slane %v28, %v32
    %vm35 = vcmask 130048
    %v37 = vsel %vm35, %v21, 0
    %39 = vmatprep.subr.mxu0 0.0
    %40 = vmatpush1.msra.mxu0 %v22
    %41 = vmatprep.subr.mxu0 0.0
    %42 = vmatpush1.msra.mxu0 %v23
    %43 = vmatprep.subr.mxu0 0.0
    %44 = vmatpush1.msra.mxu0 0.0
    %45 = vmatprep.subr.mxu0 0.0
    %46 = vmatpush1.msra.mxu0 0.0
    %47 = vmatprep.subr.mxu0 0.0
    %48 = vmatpush1.msra.mxu0 0.0
    %49 = vmatprep.subr.mxu0 0.0
    %50 = vmatpush1.msra.mxu0 0.0
    %51 = vmatprep.subr.mxu0 0.0
    %52 = vmatpush1.msra.mxu0 0.0
    %53 = vmatprep.subr.mxu0 0.0
    %54 = vmatpush1.msra.mxu0 0.0
    %55 = vmatprep.subr.mxu0 0.0
    %56 = vmatpush1.msra.mxu0 0.0
    %57 = vmatprep.subr.mxu0 0.0
    %58 = vmatpush1.msra.mxu0 0.0
    %59 = vmatprep.subr.mxu0 0.0
    %60 = vmatpush1.msra.mxu0 0.0
    %61 = vmatprep.subr.mxu0 0.0
    %62 = vmatpush1.msra.mxu0 0.0
    %63 = vmatprep.subr.mxu0 0.0
    %64 = vmatpush1.msra.mxu0 0.0
    %65 = vmatprep.subr.mxu0 0.0
    %66 = vmatpush1.msra.mxu0 0.0
    %67 = vmatprep.subr.mxu0 0.0
    %68 = vmatpush1.msra.mxu0 0.0
    %69 = vmatprep.subr.mxu0 0.0
    %70 = vmatpush1.msra.mxu0 0.0
    %71 = vmatprep.subr.mxu0 0.0
    %72 = vmatpush1.msra.mxu0 0.0
    %73 = vmatprep.subr.mxu0 0.0
    %74 = vmatpush1.msra.mxu0 0.0
    %75 = vmatprep.subr.mxu0 0.0
    %76 = vmatpush1.msra.mxu0 0.0
    %77 = vmatprep.subr.mxu0 0.0
    %78 = vmatpush1.msra.mxu0 0.0
    %79 = vmatprep.subr.mxu0 0.0
    %80 = vmatpush1.msra.mxu0 0.0
    %81 = vmatprep.subr.mxu0 0.0
    %82 = vmatpush1.msra.mxu0 0.0
    %83 = vmatprep.subr.mxu0 0.0
    %84 = vmatpush1.msra.mxu0 0.0
    %85 = vmatprep.subr.mxu0 0.0
    %86 = vmatpush1.msra.mxu0 0.0
    %87 = vmatprep.subr.mxu0 0.0
    %88 = vmatpush1.msra.mxu0 0.0
    %89 = vmatprep.subr.mxu0 0.0
    %90 = vmatpush1.msra.mxu0 0.0
    %91 = vmatprep.subr.mxu0 0.0
    %92 = vmatpush1.msra.mxu0 0.0
    %93 = vmatprep.subr.mxu0 0.0
    %94 = vmatpush1.msra.mxu0 0.0
    %95 = vmatprep.subr.mxu0 0.0
    %96 = vmatpush1.msra.mxu0 0.0
    %97 = vmatprep.subr.mxu0 0.0
    %98 = vmatpush1.msra.mxu0 0.0
    %99 = vmatprep.subr.mxu0 0.0
    %100 = vmatpush1.msra.mxu0 0.0
    %101 = vmatprep.subr.mxu0 0.0
    %102 = vmatpush1.msra.mxu0 0.0
    %103 = vmatprep.mubr.f32.mxu0 0.0
    %104 = vmatmul.mubr.f32.gmra.mrb[0].mxu0 %v37
    %v105 = vpop.f32.mrb[0].mxu0
    %v106 = vadd.f32 %v33, %v105
    %v107 = vpop.f32.mrb[0].mxu0
    %108 = vdwg.mxu0
    %v109 = vmax.f32 %v106, 0.0
    %v110 = vld [vmem:[%s4] sm:$0x1]
    %v112 = vlaneseq
    %v113 = vshrl.u32 %v112, 7
    %v114 = vsub.s32 0, %v113
    %v115 = vrot.slane %v110, %v114
    %vm117 = vcmask 261120
    %v119 = vsel %vm117, %v109, 0
    %121 = vmatprep.subr.mxu0 0.0
    %122 = vmatpush1.msra.mxu0 %v24
    %123 = vmatprep.subr.mxu0 0.0
    %124 = vmatpush1.msra.mxu0 %v25
    %125 = vmatprep.subr.mxu0 0.0
    %126 = vmatpush1.msra.mxu0 %v26
    %127 = vmatprep.subr.mxu0 0.0
    %128 = vmatpush1.msra.mxu0 %v27
    %129 = vmatprep.subr.mxu0 0.0
    %130 = vmatpush1.msra.mxu0 0.0
    %131 = vmatprep.subr.mxu0 0.0
    %132 = vmatpush1.msra.mxu0 0.0
    %133 = vmatprep.subr.mxu0 0.0
    %134 = vmatpush1.msra.mxu0 0.0
    %135 = vmatprep.subr.mxu0 0.0
    %136 = vmatpush1.msra.mxu0 0.0
    %137 = vmatprep.subr.mxu0 0.0
    %138 = vmatpush1.msra.mxu0 0.0
    %139 = vmatprep.subr.mxu0 0.0
    %140 = vmatpush1.msra.mxu0 0.0
    %141 = vmatprep.subr.mxu0 0.0
    %142 = vmatpush1.msra.mxu0 0.0
    %143 = vmatprep.subr.mxu0 0.0
    %144 = vmatpush1.msra.mxu0 0.0
    %145 = vmatprep.subr.mxu0 0.0
    %146 = vmatpush1.msra.mxu0 0.0
    %147 = vmatprep.subr.mxu0 0.0
    %148 = vmatpush1.msra.mxu0 0.0
    %149 = vmatprep.subr.mxu0 0.0
    %150 = vmatpush1.msra.mxu0 0.0
    %151 = vmatprep.subr.mxu0 0.0
    %152 = vmatpush1.msra.mxu0 0.0
    %153 = vmatprep.subr.mxu0 0.0
    %154 = vmatpush1.msra.mxu0 0.0
    %155 = vmatprep.subr.mxu0 0.0
    %156 = vmatpush1.msra.mxu0 0.0
    %157 = vmatprep.subr.mxu0 0.0
    %158 = vmatpush1.msra.mxu0 0.0
    %159 = vmatprep.subr.mxu0 0.0
    %160 = vmatpush1.msra.mxu0 0.0
    %161 = vmatprep.subr.mxu0 0.0
    %162 = vmatpush1.msra.mxu0 0.0
    %163 = vmatprep.subr.mxu0 0.0
    %164 = vmatpush1.msra.mxu0 0.0
    %165 = vmatprep.subr.mxu0 0.0
    %166 = vmatpush1.msra.mxu0 0.0
    %167 = vmatprep.subr.mxu0 0.0
    %168 = vmatpush1.msra.mxu0 0.0
    %169 = vmatprep.subr.mxu0 0.0
    %170 = vmatpush1.msra.mxu0 0.0
    %171 = vmatprep.subr.mxu0 0.0
    %172 = vmatpush1.msra.mxu0 0.0
    %173 = vmatprep.subr.mxu0 0.0
    %174 = vmatpush1.msra.mxu0 0.0
    %175 = vmatprep.subr.mxu0 0.0
    %176 = vmatpush1.msra.mxu0 0.0
    %177 = vmatprep.subr.mxu0 0.0
    %178 = vmatpush1.msra.mxu0 0.0
    %179 = vmatprep.subr.mxu0 0.0
    %180 = vmatpush1.msra.mxu0 0.0
    %181 = vmatprep.subr.mxu0 0.0
    %182 = vmatpush1.msra.mxu0 0.0
    %183 = vmatprep.subr.mxu0 0.0
    %184 = vmatpush1.msra.mxu0 0.0
    %185 = vmatprep.mubr.f32.mxu0 0.0
    %186 = vmatmul.mubr.f32.gmra.mrb[0].mxu0 %v119
    %v187 = vpop.f32.mrb[0].mxu0
    %v188 = vadd.f32 %v115, %v187
    %v189 = vpop.f32.mrb[0].mxu0
    %190 = vdwg.mxu0
    %vm191 = vcmask 64512
    %192 = vst.msk [vmem:[#allocation2] sm:$0xff] %vm191, %v188
    // Predicated region
    $region22: #{mlp_forward.1} parent=1 // pred_check
      _
    $region23: #{mlp_forward.1} parent=1 // pred_check_branch
      %194 = sbr.rel (0) target = $region25
    $region24: #{mlp_forward.1} parent=1 // pred_region
      %s196 = ssub.s32 128, 128
      %197 = vsyncadd [#allocation3], %s196
      %s199 = sshll.u32 [#allocation2], 4
      %s200 = int_to_ptr.vmem [resolvable:$true] %s199
      %202 = dma.vmem_to_hbm [thread:$0]  %s200, 128, %s5, [#allocation3]
    $region25: #{mlp_forward.1} parent=1 // pred_fallthru
      _
    // Predicated region
    $region26: #{mlp_forward.1} parent=1 // pred_check
      _
    $region27: #{mlp_forward.1} parent=1 // pred_check_branch
      %204 = sbr.rel (0) target = $region29
    $region28: #{mlp_forward.1} parent=1 // pred_region
      %205 = dma.done [#allocation3], 128
    $region29: #{mlp_forward.1} parent=1 // pred_fallthru
      _
    %206 = vsyncpa [#allocation3], 1

</llo_original>
